<compile_context>
chip_gen: v5e
topology: v5e:2x2
jax: 0.10.0
libtpu: 0.0.40
codegen_flags: <defaults>
</compile_context>

<pallas_src>
import jax
import jax.numpy as jnp
from jax.experimental import pallas as pl
from jax.experimental.pallas import tpu as pltpu


def _round_up(n, m):
    return -(-n // m) * m


def _has_bf16_vpu():
    """bf16 VALU exists on v6e/v7x; v5e/v4 and older do not."""
    try:
        kind = jax.devices()[0].device_kind.lower()
    except Exception:
        return False
    return any(tag in kind for tag in ("v6", "v7", "7x"))


def _mlp_kernel(xT_ref, w1_ref, b1_ref, w2_ref, b2_ref, w3_ref, b3_ref, o_ref):
    # ---- layer 1: 2 -> 64 on the VPU (K=2 is too small for a useful MXU pass).
    # Compute dtype follows w1 (bf16 on v6e/v7x, f32 on v5e). The x-row broadcasts
    # are (feature -> 64 sublanes); Mosaic fuses these into the FMAs per vreg.
    xT = xT_ref[...].astype(w1_ref.dtype)                 # (2, TB)
    w1 = w1_ref[...]                                      # (64, 2)
    h1 = w1[:, 0:1] * xT[0:1, :] + w1[:, 1:2] * xT[1:2, :] + b1_ref[...]
    h1 = jnp.maximum(h1, 0.0)                             # ReLU; Dropout = identity (eval)

    # ---- layer 2: 64 -> 32 on the MXU (bf16 operands, f32 accumulation).
    h2 = jnp.dot(w2_ref[...], h1.astype(w2_ref.dtype),
                 preferred_element_type=jnp.float32)      # (32, TB) f32
    h2 = jnp.maximum(h2 + b2_ref[...], 0.0)               # ReLU; Dropout = identity (eval)

    # ---- layer 3: 32 -> 6 on the MXU (kept on the MXU: VPU is the binding unit).
    h3 = jnp.dot(w3_ref[...], h2.astype(w3_ref.dtype),
                 preferred_element_type=jnp.float32)      # (6, TB) f32
    o_ref[...] = (h3 + b3_ref[...]).astype(o_ref.dtype)


def arrhythmia_net_t(xT, params, *, tile_b=None, mxu_bf16=True, l1_bf16=None,
                     out_dtype=jnp.float32):
    """Feature-major entry point: xT is (2, B) float32, returns (6, B).

    Use this form when the surrounding graph can keep data feature-major: it has
    no wrapper-side transposes or padding passes over HBM.
    """
    Fin, B = xT.shape
    assert Fin == 2

    if l1_bf16 is None:
        l1_bf16 = mxu_bf16 and _has_bf16_vpu()
    if tile_b is None:
        # Adaptive tile: never pad tiny batches up to 8192; keep 4096-8192 for
        # large batches so per-step overhead is amortised and v7x gets >=2 steps.
        tile_b = min(8192, _round_up(max(B, 1), 512))
    assert tile_b % 128 == 0, "tile_b must be a multiple of 128 (lane width)"

    l1_dt = jnp.bfloat16 if l1_bf16 else jnp.float32
    mxu_dt = jnp.bfloat16 if mxu_bf16 else jnp.float32

    w1 = params["w1"].astype(l1_dt)      # (64, 2)
    b1 = params["b1"].astype(l1_dt)      # (64, 1)
    w2 = params["w2"].astype(mxu_dt)     # (32, 64)
    b2 = params["b2"].astype(jnp.float32)  # (32, 1)
    w3 = params["w3"].astype(mxu_dt)     # (6, 32)
    b3 = params["b3"].astype(jnp.float32)  # (6, 1)

    grid = (pl.cdiv(B, tile_b),)         # no host pad; edge block is masked

    def resident(arr):
        # Tiny weights/biases: full-array resident blocks, constant index_map.
        return pl.BlockSpec(arr.shape, lambda i: (0, 0))

    outT = pl.pallas_call(
        _mlp_kernel,
        out_shape=jax.ShapeDtypeStruct((6, B), out_dtype),
        grid_spec=pltpu.PrefetchScalarGridSpec(
            num_scalar_prefetch=0,
            grid=grid,
            in_specs=[
                pl.BlockSpec((2, tile_b), lambda i: (0, i)),   # x^T tile (lane-dense)
                resident(w1), resident(b1),
                resident(w2), resident(b2),
                resident(w3), resident(b3),
            ],
            out_specs=pl.BlockSpec((6, tile_b), lambda i: (0, i)),
        ),
        compiler_params=pltpu.CompilerParams(
            dimension_semantics=("parallel",),
        ),
    )(xT, w1, b1, w2, b2, w3, b3)

    return outT


def arrhythmia_net(x, params, **kwargs):
    """PyTorch-layout convenience wrapper: x is (B, 2) float32, returns (B, 6)."""
    return arrhythmia_net_t(x.T, params, **kwargs).T


def init_params(key):
    """Deterministic init mirroring nn.Linear: W stored (out, in), b stored (out, 1)."""
    k1, k2, k3, k4, k5, k6 = jax.random.split(key, 6)

    def linear(kw, kb, fan_in, fan_out):
        bound = 1.0 / jnp.sqrt(fan_in)
        w = jax.random.uniform(kw, (fan_out, fan_in), jnp.float32, -bound, bound)
        b = jax.random.uniform(kb, (fan_out, 1), jnp.float32, -bound, bound)
        return w, b

    w1, b1 = linear(k1, k2, 2, 64)
    w2, b2 = linear(k3, k4, 64, 32)
    w3, b3 = linear(k5, k6, 32, 6)
    return dict(w1=w1, b1=b1, w2=w2, b2=b2, w3=w3, b3=b3)


def _reference(x, params, *, mxu_bf16, l1_bf16):
    """Plain-JAX reference mirroring the kernel's dtypes (or pure f32)."""
    w1, b1 = params["w1"], params["b1"]
    w2, b2 = params["w2"], params["b2"]
    w3, b3 = params["w3"], params["b3"]
    l1_dt = jnp.bfloat16 if l1_bf16 else jnp.float32
    mxu_dt = jnp.bfloat16 if mxu_bf16 else jnp.float32

    xT = x.T.astype(l1_dt)
    w1c, b1c = w1.astype(l1_dt), b1.astype(l1_dt)
    h1 = jnp.maximum(w1c[:, 0:1] * xT[0:1, :] + w1c[:, 1:2] * xT[1:2, :] + b1c, 0.0)
    h2 = jnp.dot(w2.astype(mxu_dt), h1.astype(mxu_dt),
                 preferred_element_type=jnp.float32) + b2
    h2 = jnp.maximum(h2, 0.0)
    h3 = jnp.dot(w3.astype(mxu_dt), h2.astype(mxu_dt),
                 preferred_element_type=jnp.float32) + b3
    return h3.T


if __name__ == "__main__":
    key = jax.random.PRNGKey(0)
    pkey, xkey = jax.random.split(key)

    params = init_params(pkey)
    B = 1000                                  # not a multiple of the tile: exercises the
    x = jax.random.normal(xkey, (B, 2), jnp.float32)  # masked edge block (no host pad)

    l1_bf16 = _has_bf16_vpu()

    # PyTorch-layout convenience wrapper.
    out = jax.block_until_ready(arrhythmia_net(x, params))
    assert out.shape == (B, 6)

    # Feature-major entry point (no wrapper transposes) must agree.
    outT = jax.block_until_ready(arrhythmia_net_t(x.T, params))
    assert outT.shape == (6, B)
    assert jnp.allclose(out, outT.T)

    # Numerics-matched reference (same dtypes as the kernel path).
    ref_matched = _reference(x, params, mxu_bf16=True, l1_bf16=l1_bf16)
    assert jnp.allclose(out, ref_matched, atol=2e-2, rtol=2e-2)

    # Pure-f32 PyTorch-semantics reference (looser tol for bf16 operands).
    ref_f32 = _reference(x, params, mxu_bf16=False, l1_bf16=False)
    assert jnp.allclose(out, ref_f32, atol=5e-2, rtol=5e-2)

    print("KERNEL_OK")
</pallas_src>

<mosaic_0001>
module attributes {stable_mosaic.version = 11 : i64} {
  func.func @_mlp_kernel(%arg0: i32, %arg1: memref<2x1024xf32, #tpu.memory_space<vmem>>, %arg2: memref<64x2xf32, #tpu.memory_space<vmem>>, %arg3: memref<64x1xf32, #tpu.memory_space<vmem>>, %arg4: memref<32x64xbf16, #tpu.memory_space<vmem>>, %arg5: memref<32x1xf32, #tpu.memory_space<vmem>>, %arg6: memref<6x32xbf16, #tpu.memory_space<vmem>>, %arg7: memref<6x1xf32, #tpu.memory_space<vmem>>, %arg8: memref<6x1024xf32, #tpu.memory_space<vmem>>) attributes {dimension_semantics = [#tpu.dimension_semantics<parallel>], iteration_bounds = array<i64: 1>, scalar_prefetch = 0 : i64, scratch_operands = 0 : i64, tpu.core_type = #tpu.core_type<tc>, window_params = [{transform_indices = @transform_0, window_bounds = array<i64: 2, 1024>}, {pipeline_mode = #tpu.pipeline_mode<synchronous>, transform_indices = @transform_1, window_bounds = array<i64: 64, 2>}, {pipeline_mode = #tpu.pipeline_mode<synchronous>, transform_indices = @transform_2, window_bounds = array<i64: 64, 1>}, {pipeline_mode = #tpu.pipeline_mode<synchronous>, transform_indices = @transform_3, window_bounds = array<i64: 32, 64>}, {pipeline_mode = #tpu.pipeline_mode<synchronous>, transform_indices = @transform_4, window_bounds = array<i64: 32, 1>}, {pipeline_mode = #tpu.pipeline_mode<synchronous>, transform_indices = @transform_5, window_bounds = array<i64: 6, 32>}, {pipeline_mode = #tpu.pipeline_mode<synchronous>, transform_indices = @transform_6, window_bounds = array<i64: 6, 1>}, {transform_indices = @transform_7, window_bounds = array<i64: 6, 1024>}]} {
    %c0 = arith.constant 0 : index
    %c0_0 = arith.constant 0 : index
    %0 = vector.load %arg1[%c0, %c0_0] : memref<2x1024xf32, #tpu.memory_space<vmem>>, vector<2x1024xf32>
    %c0_1 = arith.constant 0 : index
    %c0_2 = arith.constant 0 : index
    %1 = vector.load %arg2[%c0_1, %c0_2] : memref<64x2xf32, #tpu.memory_space<vmem>>, vector<64x2xf32>
    %2 = vector.extract_strided_slice %1 {offsets = [0, 0], sizes = [64, 1], strides = [1, 1]} : vector<64x2xf32> to vector<64x1xf32>
    %3 = vector.extract_strided_slice %0 {offsets = [0, 0], sizes = [1, 1024], strides = [1, 1]} : vector<2x1024xf32> to vector<1x1024xf32>
    %4 = vector.broadcast %2 : vector<64x1xf32> to vector<64x1024xf32>
    %5 = vector.broadcast %3 : vector<1x1024xf32> to vector<64x1024xf32>
    %6 = arith.mulf %4, %5 : vector<64x1024xf32>
    %7 = vector.extract_strided_slice %1 {offsets = [0, 1], sizes = [64, 1], strides = [1, 1]} : vector<64x2xf32> to vector<64x1xf32>
    %8 = vector.extract_strided_slice %0 {offsets = [1, 0], sizes = [1, 1024], strides = [1, 1]} : vector<2x1024xf32> to vector<1x1024xf32>
    %9 = vector.broadcast %7 : vector<64x1xf32> to vector<64x1024xf32>
    %10 = vector.broadcast %8 : vector<1x1024xf32> to vector<64x1024xf32>
    %11 = arith.mulf %9, %10 : vector<64x1024xf32>
    %12 = arith.addf %6, %11 : vector<64x1024xf32>
    %c0_3 = arith.constant 0 : index
    %c0_4 = arith.constant 0 : index
    %13 = vector.load %arg3[%c0_3, %c0_4] : memref<64x1xf32, #tpu.memory_space<vmem>>, vector<64x1xf32>
    %14 = vector.broadcast %13 : vector<64x1xf32> to vector<64x1024xf32>
    %15 = arith.addf %12, %14 : vector<64x1024xf32>
    %cst = arith.constant 0.000000e+00 : f32
    %16 = vector.broadcast %cst : f32 to vector<64x1024xf32>
    %17 = arith.maximumf %15, %16 : vector<64x1024xf32>
    %c0_5 = arith.constant 0 : index
    %c0_6 = arith.constant 0 : index
    %18 = vector.load %arg4[%c0_5, %c0_6] : memref<32x64xbf16, #tpu.memory_space<vmem>>, vector<32x64xbf16>
    %19 = arith.truncf %17 : vector<64x1024xf32> to vector<64x1024xbf16>
    %cst_7 = arith.constant dense<0.000000e+00> : vector<32x1024xf32>
    %20 = tpu.matmul %18, %19, %cst_7 {dimension_numbers = #tpu.dot_dimension_numbers<[1], [0], [0], [1], [0, 0, 1, 1], [], []>} : vector<32x64xbf16>, vector<64x1024xbf16>, vector<32x1024xf32> -> vector<32x1024xf32>
    %c0_8 = arith.constant 0 : index
    %c0_9 = arith.constant 0 : index
    %21 = vector.load %arg5[%c0_8, %c0_9] : memref<32x1xf32, #tpu.memory_space<vmem>>, vector<32x1xf32>
    %22 = vector.broadcast %21 : vector<32x1xf32> to vector<32x1024xf32>
    %23 = arith.addf %20, %22 : vector<32x1024xf32>
    %cst_10 = arith.constant 0.000000e+00 : f32
    %24 = vector.broadcast %cst_10 : f32 to vector<32x1024xf32>
    %25 = arith.maximumf %23, %24 : vector<32x1024xf32>
    %c0_11 = arith.constant 0 : index
    %c0_12 = arith.constant 0 : index
    %26 = vector.load %arg6[%c0_11, %c0_12] : memref<6x32xbf16, #tpu.memory_space<vmem>>, vector<6x32xbf16>
    %27 = arith.truncf %25 : vector<32x1024xf32> to vector<32x1024xbf16>
    %cst_13 = arith.constant dense<0.000000e+00> : vector<6x1024xf32>
    %28 = tpu.matmul %26, %27, %cst_13 {dimension_numbers = #tpu.dot_dimension_numbers<[1], [0], [0], [1], [0, 0, 1, 1], [], []>} : vector<6x32xbf16>, vector<32x1024xbf16>, vector<6x1024xf32> -> vector<6x1024xf32>
    %c0_14 = arith.constant 0 : index
    %c0_15 = arith.constant 0 : index
    %29 = vector.load %arg7[%c0_14, %c0_15] : memref<6x1xf32, #tpu.memory_space<vmem>>, vector<6x1xf32>
    %30 = vector.broadcast %29 : vector<6x1xf32> to vector<6x1024xf32>
    %31 = arith.addf %28, %30 : vector<6x1024xf32>
    %c0_16 = arith.constant 0 : index
    %c0_17 = arith.constant 0 : index
    %32 = vector.load %arg8[%c0_16, %c0_17] : memref<6x1024xf32, #tpu.memory_space<vmem>>, vector<6x1024xf32>
    tpu.vector_store %arg8[%c0_16, %c0_17], %31 {strides = array<i32>} : memref<6x1024xf32, #tpu.memory_space<vmem>>, vector<6x1024xf32>,
    return
  }
  func.func @transform_0(%arg0: i32) -> (i32, i32) {
    %c0_i32 = arith.constant 0 : i32
    %c0_i32_0 = arith.constant 0 : i32
    return %c0_i32, %arg0 : i32, i32
  }
  func.func @transform_1(%arg0: i32) -> (i32, i32) {
    %c0_i32 = arith.constant 0 : i32
    %c0_i32_0 = arith.constant 0 : i32
    %c0_i32_1 = arith.constant 0 : i32
    return %c0_i32, %c0_i32_0 : i32, i32
  }
  func.func @transform_2(%arg0: i32) -> (i32, i32) {
    %c0_i32 = arith.constant 0 : i32
    %c0_i32_0 = arith.constant 0 : i32
    %c0_i32_1 = arith.constant 0 : i32
    return %c0_i32, %c0_i32_0 : i32, i32
  }
  func.func @transform_3(%arg0: i32) -> (i32, i32) {
    %c0_i32 = arith.constant 0 : i32
    %c0_i32_0 = arith.constant 0 : i32
    %c0_i32_1 = arith.constant 0 : i32
    return %c0_i32, %c0_i32_0 : i32, i32
  }
  func.func @transform_4(%arg0: i32) -> (i32, i32) {
    %c0_i32 = arith.constant 0 : i32
    %c0_i32_0 = arith.constant 0 : i32
    %c0_i32_1 = arith.constant 0 : i32
    return %c0_i32, %c0_i32_0 : i32, i32
  }
  func.func @transform_5(%arg0: i32) -> (i32, i32) {
    %c0_i32 = arith.constant 0 : i32
    %c0_i32_0 = arith.constant 0 : i32
    %c0_i32_1 = arith.constant 0 : i32
    return %c0_i32, %c0_i32_0 : i32, i32
  }
  func.func @transform_6(%arg0: i32) -> (i32, i32) {
    %c0_i32 = arith.constant 0 : i32
    %c0_i32_0 = arith.constant 0 : i32
    %c0_i32_1 = arith.constant 0 : i32
    return %c0_i32, %c0_i32_0 : i32, i32
  }
  func.func @transform_7(%arg0: i32) -> (i32, i32) {
    %c0_i32 = arith.constant 0 : i32
    %c0_i32_0 = arith.constant 0 : i32
    return %c0_i32, %arg0 : i32, i32
  }
}

</mosaic_0001>

<llo_original>
// kernel: tpu_custom_call.1
$region0: #{tpu_custom_call.1}
  #allocation0 [shape = 'u32[]', space=smem, size = 0x4, offset = 0x4, fixed_abs, tag = 'smem constant byte address 0x4 - core index']
  #allocation1 [shape = 'u32[72,128]{1,0:T(1,128)}', space=vmem, size = 0x9000, scoped, tag = 'internal scratch']
  %s0 = inlined_call_operand.vmem [shape: f32[2,1000], index: 0, kind: input, shape index: {}]
  %s1 = inlined_call_operand.vmem [shape: f32[64,2], index: 1, kind: input, shape index: {}]
  %s2 = inlined_call_operand.vmem [shape: f32[64,1], index: 2, kind: input, shape index: {}]
  %s3 = inlined_call_operand.vmem [shape: bf16[32,64], index: 3, kind: input, shape index: {}]
  %s4 = inlined_call_operand.vmem [shape: f32[32,1], index: 4, kind: input, shape index: {}]
  %s5 = inlined_call_operand.vmem [shape: bf16[6,32], index: 5, kind: input, shape index: {}]
  %s6 = inlined_call_operand.vmem [shape: f32[6,1], index: 6, kind: input, shape index: {}]
  %s7 = inlined_call_operand.hbm [shape: f32[6,1000], index: 7, kind: output, shape index: {}]
  %s8 = sld [smem:[#allocation0]]
  $region38: #{tpu_custom_call.1} parent=0
    _
  %s10 = ssub.s32 1, %s8
  %s11 = scalar_select 0, %s10, %s8
  $region1: #{tpu_custom_call.1} parent=0
    #allocation2 [shape = 'u8[32768]{0}', space=vmem, size = 0x8000, scoped, tag = 'output window, operand 0, single buffered']
    #allocation3 [shape = 's32[1]{0}', space=sflag, size = 0x4, scoped, tag = 'scoped memory for tpu_custom_call.1']
    %12 = vsyncpa [#allocation3], 0
    // Predicated region
    $region2: #{tpu_custom_call.1} parent=1 // pred_check
      _
    $region3: #{tpu_custom_call.1} parent=1 // pred_check_branch
      %14 = sbr.rel (0) target = $region5
    $region4: #{tpu_custom_call.1} parent=1 // pred_region
      _
    $region5: #{tpu_custom_call.1} parent=1 // pred_fallthru
      _
    // Predicated region
    $region6: #{tpu_custom_call.1} parent=1 // pred_check
      _
    $region7: #{tpu_custom_call.1} parent=1 // pred_check_branch
      %16 = sbr.rel (0) target = $region9
    $region8: #{tpu_custom_call.1} parent=1 // pred_region
      _
    $region9: #{tpu_custom_call.1} parent=1 // pred_fallthru
      _
    // Predicated region
    $region10: #{tpu_custom_call.1} parent=1 // pred_check
      _
    $region11: #{tpu_custom_call.1} parent=1 // pred_check_branch
      %18 = sbr.rel (0) target = $region13
    $region12: #{tpu_custom_call.1} parent=1 // pred_region
      _
    $region13: #{tpu_custom_call.1} parent=1 // pred_fallthru
      _
    // Predicated region
    $region14: #{tpu_custom_call.1} parent=1 // pred_check
      _
    $region15: #{tpu_custom_call.1} parent=1 // pred_check_branch
      %20 = sbr.rel (0) target = $region17
    $region16: #{tpu_custom_call.1} parent=1 // pred_region
      _
    $region17: #{tpu_custom_call.1} parent=1 // pred_fallthru
      _
    // Predicated region
    $region18: #{tpu_custom_call.1} parent=1 // pred_check
      _
    $region19: #{tpu_custom_call.1} parent=1 // pred_check_branch
      %22 = sbr.rel (0) target = $region21
    $region20: #{tpu_custom_call.1} parent=1 // pred_region
      _
    $region21: #{tpu_custom_call.1} parent=1 // pred_fallthru
      _
    // Predicated region
    $region22: #{tpu_custom_call.1} parent=1 // pred_check
      _
    $region23: #{tpu_custom_call.1} parent=1 // pred_check_branch
      %24 = sbr.rel (0) target = $region25
    $region24: #{tpu_custom_call.1} parent=1 // pred_region
      _
    $region25: #{tpu_custom_call.1} parent=1 // pred_fallthru
      _
    // Predicated region
    $region26: #{tpu_custom_call.1} parent=1 // pred_check
      _
    $region27: #{tpu_custom_call.1} parent=1 // pred_check_branch
      %26 = sbr.rel (0) target = $region29
    $region28: #{tpu_custom_call.1} parent=1 // pred_region
      _
    $region29: #{tpu_custom_call.1} parent=1 // pred_fallthru
      _
    %v28 = vld [vmem:[%s0] sm:$0xff]
    %v29 = vld [vmem:[%s0 + $0x8] sm:$0xff]
    %v30 = vld [vmem:[%s1] sm:$0xff]
    %v31 = vld [vmem:[%s1 + $0x8] sm:$0xff]
    %v32 = vld [vmem:[%s1 + $0x10] sm:$0xff]
    %v33 = vld [vmem:[%s1 + $0x18] sm:$0xff]
    %v34 = vld [vmem:[%s1 + $0x20] sm:$0xff]
    %v35 = vld [vmem:[%s1 + $0x28] sm:$0xff]
    %v36 = vld [vmem:[%s1 + $0x30] sm:$0xff]
    %v37 = vld [vmem:[%s1 + $0x38] sm:$0xff]
    %39 = vset.pattern.permute.xlu0 0
    %40 = vperm.xlu0 %39, %v30
    %v41 = vpop.permute.xlu0 %40
    %44 = vset.pattern.permute.xlu0 0
    %45 = vperm.xlu0 %44, %v31
    %v46 = vpop.permute.xlu0 %45
    %49 = vset.pattern.permute.xlu0 0
    %50 = vperm.xlu0 %49, %v32
    %v51 = vpop.permute.xlu0 %50
    %54 = vset.pattern.permute.xlu0 0
    %55 = vperm.xlu0 %54, %v33
    %v56 = vpop.permute.xlu0 %55
    %59 = vset.pattern.permute.xlu0 0
    %60 = vperm.xlu0 %59, %v34
    %v61 = vpop.permute.xlu0 %60
    %64 = vset.pattern.permute.xlu0 0
    %65 = vperm.xlu0 %64, %v35
    %v66 = vpop.permute.xlu0 %65
    %69 = vset.pattern.permute.xlu0 0
    %70 = vperm.xlu0 %69, %v36
    %v71 = vpop.permute.xlu0 %70
    %74 = vset.pattern.permute.xlu0 0
    %75 = vperm.xlu0 %74, %v37
    %v76 = vpop.permute.xlu0 %75
    %v80 = vperm.slane %v28, 0
    %v81 = vperm.slane %v28, 2
    %v82 = vperm.slane %v28, 4
    %v83 = vperm.slane %v28, 6
    %v84 = vperm.slane %v29, 0
    %v85 = vperm.slane %v29, 2
    %v86 = vperm.slane %v29, 4
    %v87 = vperm.slane %v29, 6
    %v96 = vperm.slane %v80, 0
    %v97 = vperm.slane %v81, 0
    %v98 = vperm.slane %v82, 0
    %v99 = vperm.slane %v83, 0
    %v100 = vperm.slane %v84, 0
    %v101 = vperm.slane %v85, 0
    %v102 = vperm.slane %v86, 0
    %v103 = vperm.slane %v87, 0
    %v104 = vmul.f32 %v41, %v96
    %v105 = vmul.f32 %v41, %v97
    %v106 = vmul.f32 %v41, %v98
    %v107 = vmul.f32 %v41, %v99
    %v108 = vmul.f32 %v41, %v100
    %v109 = vmul.f32 %v41, %v101
    %v110 = vmul.f32 %v41, %v102
    %v111 = vmul.f32 %v41, %v103
    %v112 = vmul.f32 %v46, %v96
    %v113 = vmul.f32 %v46, %v97
    %v114 = vmul.f32 %v46, %v98
    %v115 = vmul.f32 %v46, %v99
    %v116 = vmul.f32 %v46, %v100
    %v117 = vmul.f32 %v46, %v101
    %v118 = vmul.f32 %v46, %v102
    %v119 = vmul.f32 %v46, %v103
    %v120 = vmul.f32 %v51, %v96
    %v121 = vmul.f32 %v51, %v97
    %v122 = vmul.f32 %v51, %v98
    %v123 = vmul.f32 %v51, %v99
    %v124 = vmul.f32 %v51, %v100
    %v125 = vmul.f32 %v51, %v101
    %v126 = vmul.f32 %v51, %v102
    %v127 = vmul.f32 %v51, %v103
    %v128 = vmul.f32 %v56, %v96
    %v129 = vmul.f32 %v56, %v97
    %v130 = vmul.f32 %v56, %v98
    %v131 = vmul.f32 %v56, %v99
    %v132 = vmul.f32 %v56, %v100
    %v133 = vmul.f32 %v56, %v101
    %v134 = vmul.f32 %v56, %v102
    %v135 = vmul.f32 %v56, %v103
    %v136 = vmul.f32 %v61, %v96
    %v137 = vmul.f32 %v61, %v97
    %v138 = vmul.f32 %v61, %v98
    %v139 = vmul.f32 %v61, %v99
    %v140 = vmul.f32 %v61, %v100
    %v141 = vmul.f32 %v61, %v101
    %v142 = vmul.f32 %v61, %v102
    %v143 = vmul.f32 %v61, %v103
    %v144 = vmul.f32 %v66, %v96
    %v145 = vmul.f32 %v66, %v97
    %v146 = vmul.f32 %v66, %v98
    %v147 = vmul.f32 %v66, %v99
    %v148 = vmul.f32 %v66, %v100
    %v149 = vmul.f32 %v66, %v101
    %v150 = vmul.f32 %v66, %v102
    %v151 = vmul.f32 %v66, %v103
    %v152 = vmul.f32 %v71, %v96
    %v153 = vmul.f32 %v71, %v97
    %v154 = vmul.f32 %v71, %v98
    %v155 = vmul.f32 %v71, %v99
    %v156 = vmul.f32 %v71, %v100
    %v157 = vmul.f32 %v71, %v101
    %v158 = vmul.f32 %v71, %v102
    %v159 = vmul.f32 %v71, %v103
    %v160 = vmul.f32 %v76, %v96
    %v161 = vmul.f32 %v76, %v97
    %v162 = vmul.f32 %v76, %v98
    %v163 = vmul.f32 %v76, %v99
    %v164 = vmul.f32 %v76, %v100
    %v165 = vmul.f32 %v76, %v101
    %v166 = vmul.f32 %v76, %v102
    %v167 = vmul.f32 %v76, %v103
    %168 = vset.pattern.permute.xlu0 1
    %169 = vperm.xlu0 %168, %v30
    %v170 = vpop.permute.xlu0 %169
    %172 = vset.pattern.permute.xlu0 1
    %173 = vperm.xlu0 %172, %v31
    %v174 = vpop.permute.xlu0 %173
    %176 = vset.pattern.permute.xlu0 1
    %177 = vperm.xlu0 %176, %v32
    %v178 = vpop.permute.xlu0 %177
    %180 = vset.pattern.permute.xlu0 1
    %181 = vperm.xlu0 %180, %v33
    %v182 = vpop.permute.xlu0 %181
    %184 = vset.pattern.permute.xlu0 1
    %185 = vperm.xlu0 %184, %v34
    %v186 = vpop.permute.xlu0 %185
    %188 = vset.pattern.permute.xlu0 1
    %189 = vperm.xlu0 %188, %v35
    %v190 = vpop.permute.xlu0 %189
    %192 = vset.pattern.permute.xlu0 1
    %193 = vperm.xlu0 %192, %v36
    %v194 = vpop.permute.xlu0 %193
    %196 = vset.pattern.permute.xlu0 1
    %197 = vperm.xlu0 %196, %v37
    %v198 = vpop.permute.xlu0 %197
    %v200 = vperm.slane %v28, 1
    %v201 = vperm.slane %v28, 3
    %v202 = vperm.slane %v28, 5
    %v203 = vperm.slane %v28, 7
    %v204 = vperm.slane %v29, 1
    %v205 = vperm.slane %v29, 3
    %v206 = vperm.slane %v29, 5
    %v207 = vperm.slane %v29, 7
    %v216 = vperm.slane %v200, 1
    %v217 = vperm.slane %v201, 1
    %v218 = vperm.slane %v202, 1
    %v219 = vperm.slane %v203, 1
    %v220 = vperm.slane %v204, 1
    %v221 = vperm.slane %v205, 1
    %v222 = vperm.slane %v206, 1
    %v223 = vperm.slane %v207, 1
    %v224 = vmul.f32 %v170, %v216
    %v225 = vmul.f32 %v170, %v217
    %v226 = vmul.f32 %v170, %v218
    %v227 = vmul.f32 %v170, %v219
    %v228 = vmul.f32 %v170, %v220
    %v229 = vmul.f32 %v170, %v221
    %v230 = vmul.f32 %v170, %v222
    %v231 = vmul.f32 %v170, %v223
    %v232 = vmul.f32 %v174, %v216
    %v233 = vmul.f32 %v174, %v217
    %v234 = vmul.f32 %v174, %v218
    %v235 = vmul.f32 %v174, %v219
    %v236 = vmul.f32 %v174, %v220
    %v237 = vmul.f32 %v174, %v221
    %v238 = vmul.f32 %v174, %v222
    %v239 = vmul.f32 %v174, %v223
    %v240 = vmul.f32 %v178, %v216
    %v241 = vmul.f32 %v178, %v217
    %v242 = vmul.f32 %v178, %v218
    %v243 = vmul.f32 %v178, %v219
    %v244 = vmul.f32 %v178, %v220
    %v245 = vmul.f32 %v178, %v221
    %v246 = vmul.f32 %v178, %v222
    %v247 = vmul.f32 %v178, %v223
    %v248 = vmul.f32 %v182, %v216
    %v249 = vmul.f32 %v182, %v217
    %v250 = vmul.f32 %v182, %v218
    %v251 = vmul.f32 %v182, %v219
    %v252 = vmul.f32 %v182, %v220
    %v253 = vmul.f32 %v182, %v221
    %v254 = vmul.f32 %v182, %v222
    %v255 = vmul.f32 %v182, %v223
    %v256 = vmul.f32 %v186, %v216
    %v257 = vmul.f32 %v186, %v217
    %v258 = vmul.f32 %v186, %v218
    %v259 = vmul.f32 %v186, %v219
    %v260 = vmul.f32 %v186, %v220
    %v261 = vmul.f32 %v186, %v221
    %v262 = vmul.f32 %v186, %v222
    %v263 = vmul.f32 %v186, %v223
    %v264 = vmul.f32 %v190, %v216
    %v265 = vmul.f32 %v190, %v217
    %v266 = vmul.f32 %v190, %v218
    %v267 = vmul.f32 %v190, %v219
    %v268 = vmul.f32 %v190, %v220
    %v269 = vmul.f32 %v190, %v221
    %v270 = vmul.f32 %v190, %v222
    %v271 = vmul.f32 %v190, %v223
    %v272 = vmul.f32 %v194, %v216
    %v273 = vmul.f32 %v194, %v217
    %v274 = vmul.f32 %v194, %v218
    %v275 = vmul.f32 %v194, %v219
    %v276 = vmul.f32 %v194, %v220
    %v277 = vmul.f32 %v194, %v221
    %v278 = vmul.f32 %v194, %v222
    %v279 = vmul.f32 %v194, %v223
    %v280 = vmul.f32 %v198, %v216
    %v281 = vmul.f32 %v198, %v217
    %v282 = vmul.f32 %v198, %v218
    %v283 = vmul.f32 %v198, %v219
    %v284 = vmul.f32 %v198, %v220
    %v285 = vmul.f32 %v198, %v221
    %v286 = vmul.f32 %v198, %v222
    %v287 = vmul.f32 %v198, %v223
    %v288 = vadd.f32 %v104, %v224
    %v289 = vadd.f32 %v105, %v225
    %v290 = vadd.f32 %v106, %v226
    %v291 = vadd.f32 %v107, %v227
    %v292 = vadd.f32 %v108, %v228
    %v293 = vadd.f32 %v109, %v229
    %v294 = vadd.f32 %v110, %v230
    %v295 = vadd.f32 %v111, %v231
    %v296 = vadd.f32 %v112, %v232
    %v297 = vadd.f32 %v113, %v233
    %v298 = vadd.f32 %v114, %v234
    %v299 = vadd.f32 %v115, %v235
    %v300 = vadd.f32 %v116, %v236
    %v301 = vadd.f32 %v117, %v237
    %v302 = vadd.f32 %v118, %v238
    %v303 = vadd.f32 %v119, %v239
    %v304 = vadd.f32 %v120, %v240
    %v305 = vadd.f32 %v121, %v241
    %v306 = vadd.f32 %v122, %v242
    %v307 = vadd.f32 %v123, %v243
    %v308 = vadd.f32 %v124, %v244
    %v309 = vadd.f32 %v125, %v245
    %v310 = vadd.f32 %v126, %v246
    %v311 = vadd.f32 %v127, %v247
    %v312 = vadd.f32 %v128, %v248
    %v313 = vadd.f32 %v129, %v249
    %v314 = vadd.f32 %v130, %v250
    %v315 = vadd.f32 %v131, %v251
    %v316 = vadd.f32 %v132, %v252
    %v317 = vadd.f32 %v133, %v253
    %v318 = vadd.f32 %v134, %v254
    %v319 = vadd.f32 %v135, %v255
    %v320 = vadd.f32 %v136, %v256
    %v321 = vadd.f32 %v137, %v257
    %v322 = vadd.f32 %v138, %v258
    %v323 = vadd.f32 %v139, %v259
    %v324 = vadd.f32 %v140, %v260
    %v325 = vadd.f32 %v141, %v261
    %v326 = vadd.f32 %v142, %v262
    %v327 = vadd.f32 %v143, %v263
    %v328 = vadd.f32 %v144, %v264
    %v329 = vadd.f32 %v145, %v265
    %v330 = vadd.f32 %v146, %v266
    %v331 = vadd.f32 %v147, %v267
    %v332 = vadd.f32 %v148, %v268
    %v333 = vadd.f32 %v149, %v269
    %v334 = vadd.f32 %v150, %v270
    %v335 = vadd.f32 %v151, %v271
    %v336 = vadd.f32 %v152, %v272
    %v337 = vadd.f32 %v153, %v273
    %v338 = vadd.f32 %v154, %v274
    %v339 = vadd.f32 %v155, %v275
    %v340 = vadd.f32 %v156, %v276
    %v341 = vadd.f32 %v157, %v277
    %v342 = vadd.f32 %v158, %v278
    %v343 = vadd.f32 %v159, %v279
    %v344 = vadd.f32 %v160, %v280
    %v345 = vadd.f32 %v161, %v281
    %v346 = vadd.f32 %v162, %v282
    %v347 = vadd.f32 %v163, %v283
    %v348 = vadd.f32 %v164, %v284
    %v349 = vadd.f32 %v165, %v285
    %v350 = vadd.f32 %v166, %v286
    %v351 = vadd.f32 %v167, %v287
    %v352 = vld [vmem:[%s2] sm:$0xff]
    %v353 = vld [vmem:[%s2 + $0x8] sm:$0xff]
    %v354 = vld [vmem:[%s2 + $0x10] sm:$0xff]
    %v355 = vld [vmem:[%s2 + $0x18] sm:$0xff]
    %v356 = vld [vmem:[%s2 + $0x20] sm:$0xff]
    %v357 = vld [vmem:[%s2 + $0x28] sm:$0xff]
    %v358 = vld [vmem:[%s2 + $0x30] sm:$0xff]
    %v359 = vld [vmem:[%s2 + $0x38] sm:$0xff]
    %361 = vset.pattern.permute.xlu0 0
    %362 = vperm.xlu0 %361, %v352
    %v363 = vpop.permute.xlu0 %362
    %366 = vset.pattern.permute.xlu0 0
    %367 = vperm.xlu0 %366, %v353
    %v368 = vpop.permute.xlu0 %367
    %371 = vset.pattern.permute.xlu0 0
    %372 = vperm.xlu0 %371, %v354
    %v373 = vpop.permute.xlu0 %372
    %376 = vset.pattern.permute.xlu0 0
    %377 = vperm.xlu0 %376, %v355
    %v378 = vpop.permute.xlu0 %377
    %381 = vset.pattern.permute.xlu0 0
    %382 = vperm.xlu0 %381, %v356
    %v383 = vpop.permute.xlu0 %382
    %386 = vset.pattern.permute.xlu0 0
    %387 = vperm.xlu0 %386, %v357
    %v388 = vpop.permute.xlu0 %387
    %391 = vset.pattern.permute.xlu0 0
    %392 = vperm.xlu0 %391, %v358
    %v393 = vpop.permute.xlu0 %392
    %396 = vset.pattern.permute.xlu0 0
    %397 = vperm.xlu0 %396, %v359
    %v398 = vpop.permute.xlu0 %397
    %v400 = vadd.f32 %v288, %v363
    %v401 = vadd.f32 %v289, %v363
    %v402 = vadd.f32 %v290, %v363
    %v403 = vadd.f32 %v291, %v363
    %v404 = vadd.f32 %v292, %v363
    %v405 = vadd.f32 %v293, %v363
    %v406 = vadd.f32 %v294, %v363
    %v407 = vadd.f32 %v295, %v363
    %v408 = vadd.f32 %v296, %v368
    %v409 = vadd.f32 %v297, %v368
    %v410 = vadd.f32 %v298, %v368
    %v411 = vadd.f32 %v299, %v368
    %v412 = vadd.f32 %v300, %v368
    %v413 = vadd.f32 %v301, %v368
    %v414 = vadd.f32 %v302, %v368
    %v415 = vadd.f32 %v303, %v368
    %v416 = vadd.f32 %v304, %v373
    %v417 = vadd.f32 %v305, %v373
    %v418 = vadd.f32 %v306, %v373
    %v419 = vadd.f32 %v307, %v373
    %v420 = vadd.f32 %v308, %v373
    %v421 = vadd.f32 %v309, %v373
    %v422 = vadd.f32 %v310, %v373
    %v423 = vadd.f32 %v311, %v373
    %v424 = vadd.f32 %v312, %v378
    %v425 = vadd.f32 %v313, %v378
    %v426 = vadd.f32 %v314, %v378
    %v427 = vadd.f32 %v315, %v378
    %v428 = vadd.f32 %v316, %v378
    %v429 = vadd.f32 %v317, %v378
    %v430 = vadd.f32 %v318, %v378
    %v431 = vadd.f32 %v319, %v378
    %v432 = vadd.f32 %v320, %v383
    %v433 = vadd.f32 %v321, %v383
    %v434 = vadd.f32 %v322, %v383
    %v435 = vadd.f32 %v323, %v383
    %v436 = vadd.f32 %v324, %v383
    %v437 = vadd.f32 %v325, %v383
    %v438 = vadd.f32 %v326, %v383
    %v439 = vadd.f32 %v327, %v383
    %v440 = vadd.f32 %v328, %v388
    %v441 = vadd.f32 %v329, %v388
    %v442 = vadd.f32 %v330, %v388
    %v443 = vadd.f32 %v331, %v388
    %v444 = vadd.f32 %v332, %v388
    %v445 = vadd.f32 %v333, %v388
    %v446 = vadd.f32 %v334, %v388
    %v447 = vadd.f32 %v335, %v388
    %v448 = vadd.f32 %v336, %v393
    %v449 = vadd.f32 %v337, %v393
    %v450 = vadd.f32 %v338, %v393
    %v451 = vadd.f32 %v339, %v393
    %v452 = vadd.f32 %v340, %v393
    %v453 = vadd.f32 %v341, %v393
    %v454 = vadd.f32 %v342, %v393
    %v455 = vadd.f32 %v343, %v393
    %v456 = vadd.f32 %v344, %v398
    %v457 = vadd.f32 %v345, %v398
    %v458 = vadd.f32 %v346, %v398
    %v459 = vadd.f32 %v347, %v398
    %v460 = vadd.f32 %v348, %v398
    %v461 = vadd.f32 %v349, %v398
    %v462 = vadd.f32 %v350, %v398
    %v463 = vadd.f32 %v351, %v398
    %v464 = vmax.f32 %v400, 0.0
    %v465 = vmax.f32 %v401, 0.0
    %v466 = vmax.f32 %v402, 0.0
    %v467 = vmax.f32 %v403, 0.0
    %v468 = vmax.f32 %v404, 0.0
    %v469 = vmax.f32 %v405, 0.0
    %v470 = vmax.f32 %v406, 0.0
    %v471 = vmax.f32 %v407, 0.0
    %v472 = vmax.f32 %v408, 0.0
    %v473 = vmax.f32 %v409, 0.0
    %v474 = vmax.f32 %v410, 0.0
    %v475 = vmax.f32 %v411, 0.0
    %v476 = vmax.f32 %v412, 0.0
    %v477 = vmax.f32 %v413, 0.0
    %v478 = vmax.f32 %v414, 0.0
    %v479 = vmax.f32 %v415, 0.0
    %v480 = vmax.f32 %v416, 0.0
    %v481 = vmax.f32 %v417, 0.0
    %v482 = vmax.f32 %v418, 0.0
    %v483 = vmax.f32 %v419, 0.0
    %v484 = vmax.f32 %v420, 0.0
    %v485 = vmax.f32 %v421, 0.0
    %v486 = vmax.f32 %v422, 0.0
    %v487 = vmax.f32 %v423, 0.0
    %v488 = vmax.f32 %v424, 0.0
    %v489 = vmax.f32 %v425, 0.0
    %v490 = vmax.f32 %v426, 0.0
    %v491 = vmax.f32 %v427, 0.0
    %v492 = vmax.f32 %v428, 0.0
    %v493 = vmax.f32 %v429, 0.0
    %v494 = vmax.f32 %v430, 0.0
    %v495 = vmax.f32 %v431, 0.0
    %v496 = vmax.f32 %v432, 0.0
    %v497 = vmax.f32 %v433, 0.0
    %v498 = vmax.f32 %v434, 0.0
    %v499 = vmax.f32 %v435, 0.0
    %v500 = vmax.f32 %v436, 0.0
    %v501 = vmax.f32 %v437, 0.0
    %v502 = vmax.f32 %v438, 0.0
    %v503 = vmax.f32 %v439, 0.0
    %v504 = vmax.f32 %v440, 0.0
    %v505 = vmax.f32 %v441, 0.0
    %v506 = vmax.f32 %v442, 0.0
    %v507 = vmax.f32 %v443, 0.0
    %v508 = vmax.f32 %v444, 0.0
    %v509 = vmax.f32 %v445, 0.0
    %v510 = vmax.f32 %v446, 0.0
    %v511 = vmax.f32 %v447, 0.0
    %v512 = vmax.f32 %v448, 0.0
    %v513 = vmax.f32 %v449, 0.0
    %v514 = vmax.f32 %v450, 0.0
    %v515 = vmax.f32 %v451, 0.0
    %v516 = vmax.f32 %v452, 0.0
    %v517 = vmax.f32 %v453, 0.0
    %v518 = vmax.f32 %v454, 0.0
    %v519 = vmax.f32 %v455, 0.0
    %v520 = vmax.f32 %v456, 0.0
    %v521 = vmax.f32 %v457, 0.0
    %v522 = vmax.f32 %v458, 0.0
    %v523 = vmax.f32 %v459, 0.0
    %v524 = vmax.f32 %v460, 0.0
    %v525 = vmax.f32 %v461, 0.0
    %v526 = vmax.f32 %v462, 0.0
    %v527 = vmax.f32 %v463, 0.0
    %v528 = vld [vmem:[%s3] sm:$0xf]
    %v529 = vld [vmem:[%s3 + $0x4] sm:$0xf]
    %v530 = vld [vmem:[%s3 + $0x8] sm:$0xf]
    %v531 = vld [vmem:[%s3 + $0xc] sm:$0xf]
    %v532 = vpack.c.bf16 %v472, %v464
    %v533 = vpack.c.bf16 %v473, %v465
    %v534 = vpack.c.bf16 %v474, %v466
    %v535 = vpack.c.bf16 %v475, %v467
    %v536 = vpack.c.bf16 %v476, %v468
    %v537 = vpack.c.bf16 %v477, %v469
    %v538 = vpack.c.bf16 %v478, %v470
    %v539 = vpack.c.bf16 %v479, %v471
    %v540 = vpack.c.bf16 %v488, %v480
    %v541 = vpack.c.bf16 %v489, %v481
    %v542 = vpack.c.bf16 %v490, %v482
    %v543 = vpack.c.bf16 %v491, %v483
    %v544 = vpack.c.bf16 %v492, %v484
    %v545 = vpack.c.bf16 %v493, %v485
    %v546 = vpack.c.bf16 %v494, %v486
    %v547 = vpack.c.bf16 %v495, %v487
    %v548 = vpack.c.bf16 %v504, %v496
    %v549 = vpack.c.bf16 %v505, %v497
    %v550 = vpack.c.bf16 %v506, %v498
    %v551 = vpack.c.bf16 %v507, %v499
    %v552 = vpack.c.bf16 %v508, %v500
    %v553 = vpack.c.bf16 %v509, %v501
    %v554 = vpack.c.bf16 %v510, %v502
    %v555 = vpack.c.bf16 %v511, %v503
    %v556 = vpack.c.bf16 %v520, %v512
    %v557 = vpack.c.bf16 %v521, %v513
    %v558 = vpack.c.bf16 %v522, %v514
    %v559 = vpack.c.bf16 %v523, %v515
    %v560 = vpack.c.bf16 %v524, %v516
    %v561 = vpack.c.bf16 %v525, %v517
    %v562 = vpack.c.bf16 %v526, %v518
    %v563 = vpack.c.bf16 %v527, %v519
    %v564 = vld [vmem:[%s4] sm:$0xff]
    %v565 = vld [vmem:[%s4 + $0x8] sm:$0xff]
    %v566 = vld [vmem:[%s4 + $0x10] sm:$0xff]
    %v567 = vld [vmem:[%s4 + $0x18] sm:$0xff]
    %569 = vset.pattern.permute.xlu0 0
    %570 = vperm.xlu0 %569, %v564
    %v571 = vpop.permute.xlu0 %570
    %574 = vset.pattern.permute.xlu0 0
    %575 = vperm.xlu0 %574, %v565
    %v576 = vpop.permute.xlu0 %575
    %579 = vset.pattern.permute.xlu0 0
    %580 = vperm.xlu0 %579, %v566
    %v581 = vpop.permute.xlu0 %580
    %584 = vset.pattern.permute.xlu0 0
    %585 = vperm.xlu0 %584, %v567
    %v586 = vpop.permute.xlu0 %585
    %v592 = vunpack.c.l.b16 %v528
    %v593 = vunpack.c.l.b16 %v529
    %v594 = vunpack.c.l.b16 %v530
    %v595 = vunpack.c.l.b16 %v531
    %v596 = vpack.c.b16 %v593, %v592
    %v597 = vpack.c.b16 %v595, %v594
    %vm598 = vcmask 523264
    %v600 = vsel %vm598, %v596, 0
    %v603 = vsel %vm598, %v597, 0
    %605 = vmatpush.bf16.msra.mxu0 0
    %606 = vmatpush.bf16.msra.mxu0 0
    %607 = vmatpush.bf16.msra.mxu0 0
    %608 = vmatpush.bf16.msra.mxu0 0
    %609 = vmatpush.bf16.msra.mxu0 %v556
    %610 = vmatpush.bf16.msra.mxu0 %v548
    %611 = vmatpush.bf16.msra.mxu0 %v540
    %612 = vmatpush.bf16.msra.mxu0 %v532
    %613 = vmatmul.bf16.gmra.mxu0 %v600
    %v614 = vpop.f32.mrf.mxu0
    %v615 = vadd.f32 %v571, %v614
    %v616 = vpop.f32.mrf.mxu0
    %v617 = vadd.f32 %v576, %v616
    %618 = vmatmul.bf16.gmra.mxu0 %v603
    %v619 = vpop.f32.mrf.mxu0
    %v620 = vadd.f32 %v581, %v619
    %v621 = vpop.f32.mrf.mxu0
    %v622 = vadd.f32 %v586, %v621
    %623 = vdwg.mxu0
    %624 = vmatpush.bf16.msra.mxu0 0
    %625 = vmatpush.bf16.msra.mxu0 0
    %626 = vmatpush.bf16.msra.mxu0 0
    %627 = vmatpush.bf16.msra.mxu0 0
    %628 = vmatpush.bf16.msra.mxu0 %v557
    %629 = vmatpush.bf16.msra.mxu0 %v549
    %630 = vmatpush.bf16.msra.mxu0 %v541
    %631 = vmatpush.bf16.msra.mxu0 %v533
    %632 = vmatmul.bf16.gmra.mxu0 %v600
    %v633 = vpop.f32.mrf.mxu0
    %v634 = vadd.f32 %v571, %v633
    %v635 = vpop.f32.mrf.mxu0
    %v636 = vadd.f32 %v576, %v635
    %637 = vmatmul.bf16.gmra.mxu0 %v603
    %v638 = vpop.f32.mrf.mxu0
    %v639 = vadd.f32 %v581, %v638
    %v640 = vpop.f32.mrf.mxu0
    %v641 = vadd.f32 %v586, %v640
    %642 = vdwg.mxu0
    %643 = vmatpush.bf16.msra.mxu0 0
    %644 = vmatpush.bf16.msra.mxu0 0
    %645 = vmatpush.bf16.msra.mxu0 0
    %646 = vmatpush.bf16.msra.mxu0 0
    %647 = vmatpush.bf16.msra.mxu0 %v558
    %648 = vmatpush.bf16.msra.mxu0 %v550
    %649 = vmatpush.bf16.msra.mxu0 %v542
    %650 = vmatpush.bf16.msra.mxu0 %v534
    %651 = vmatmul.bf16.gmra.mxu0 %v600
    %v652 = vpop.f32.mrf.mxu0
    %v653 = vadd.f32 %v571, %v652
    %v654 = vpop.f32.mrf.mxu0
    %v655 = vadd.f32 %v576, %v654
    %656 = vmatmul.bf16.gmra.mxu0 %v603
    %v657 = vpop.f32.mrf.mxu0
    %v658 = vadd.f32 %v581, %v657
    %v659 = vpop.f32.mrf.mxu0
    %v660 = vadd.f32 %v586, %v659
    %661 = vdwg.mxu0
    %662 = vmatpush.bf16.msra.mxu0 0
    %663 = vmatpush.bf16.msra.mxu0 0
    %664 = vmatpush.bf16.msra.mxu0 0
    %665 = vmatpush.bf16.msra.mxu0 0
    %666 = vmatpush.bf16.msra.mxu0 %v559
    %667 = vmatpush.bf16.msra.mxu0 %v551
    %668 = vmatpush.bf16.msra.mxu0 %v543
    %669 = vmatpush.bf16.msra.mxu0 %v535
    %670 = vmatmul.bf16.gmra.mxu0 %v600
    %v671 = vpop.f32.mrf.mxu0
    %v672 = vadd.f32 %v571, %v671
    %v673 = vpop.f32.mrf.mxu0
    %v674 = vadd.f32 %v576, %v673
    %675 = vmatmul.bf16.gmra.mxu0 %v603
    %v676 = vpop.f32.mrf.mxu0
    %v677 = vadd.f32 %v581, %v676
    %v678 = vpop.f32.mrf.mxu0
    %v679 = vadd.f32 %v586, %v678
    %680 = vdwg.mxu0
    %681 = vmatpush.bf16.msra.mxu0 0
    %682 = vmatpush.bf16.msra.mxu0 0
    %683 = vmatpush.bf16.msra.mxu0 0
    %684 = vmatpush.bf16.msra.mxu0 0
    %685 = vmatpush.bf16.msra.mxu0 %v560
    %686 = vmatpush.bf16.msra.mxu0 %v552
    %687 = vmatpush.bf16.msra.mxu0 %v544
    %688 = vmatpush.bf16.msra.mxu0 %v536
    %689 = vmatmul.bf16.gmra.mxu0 %v600
    %v690 = vpop.f32.mrf.mxu0
    %v691 = vadd.f32 %v571, %v690
    %v692 = vpop.f32.mrf.mxu0
    %v693 = vadd.f32 %v576, %v692
    %694 = vmatmul.bf16.gmra.mxu0 %v603
    %v695 = vpop.f32.mrf.mxu0
    %v696 = vadd.f32 %v581, %v695
    %v697 = vpop.f32.mrf.mxu0
    %v698 = vadd.f32 %v586, %v697
    %699 = vdwg.mxu0
    %700 = vmatpush.bf16.msra.mxu0 0
    %701 = vmatpush.bf16.msra.mxu0 0
    %702 = vmatpush.bf16.msra.mxu0 0
    %703 = vmatpush.bf16.msra.mxu0 0
    %704 = vmatpush.bf16.msra.mxu0 %v561
    %705 = vmatpush.bf16.msra.mxu0 %v553
    %706 = vmatpush.bf16.msra.mxu0 %v545
    %707 = vmatpush.bf16.msra.mxu0 %v537
    %708 = vmatmul.bf16.gmra.mxu0 %v600
    %v709 = vpop.f32.mrf.mxu0
    %v710 = vadd.f32 %v571, %v709
    %v711 = vpop.f32.mrf.mxu0
    %v712 = vadd.f32 %v576, %v711
    %713 = vmatmul.bf16.gmra.mxu0 %v603
    %v714 = vpop.f32.mrf.mxu0
    %v715 = vadd.f32 %v581, %v714
    %v716 = vpop.f32.mrf.mxu0
    %v717 = vadd.f32 %v586, %v716
    %718 = vdwg.mxu0
    %719 = vmatpush.bf16.msra.mxu0 0
    %720 = vmatpush.bf16.msra.mxu0 0
    %721 = vmatpush.bf16.msra.mxu0 0
    %722 = vmatpush.bf16.msra.mxu0 0
    %723 = vmatpush.bf16.msra.mxu0 %v562
    %724 = vmatpush.bf16.msra.mxu0 %v554
    %725 = vmatpush.bf16.msra.mxu0 %v546
    %726 = vmatpush.bf16.msra.mxu0 %v538
    %727 = vmatmul.bf16.gmra.mxu0 %v600
    %v728 = vpop.f32.mrf.mxu0
    %v729 = vadd.f32 %v571, %v728
    %v730 = vpop.f32.mrf.mxu0
    %v731 = vadd.f32 %v576, %v730
    %732 = vmatmul.bf16.gmra.mxu0 %v603
    %v733 = vpop.f32.mrf.mxu0
    %v734 = vadd.f32 %v581, %v733
    %v735 = vpop.f32.mrf.mxu0
    %v736 = vadd.f32 %v586, %v735
    %737 = vdwg.mxu0
    %738 = vmatpush.bf16.msra.mxu0 0
    %739 = vmatpush.bf16.msra.mxu0 0
    %740 = vmatpush.bf16.msra.mxu0 0
    %741 = vmatpush.bf16.msra.mxu0 0
    %742 = vmatpush.bf16.msra.mxu0 %v563
    %743 = vmatpush.bf16.msra.mxu0 %v555
    %744 = vmatpush.bf16.msra.mxu0 %v547
    %745 = vmatpush.bf16.msra.mxu0 %v539
    %746 = vmatmul.bf16.gmra.mxu0 %v600
    %v747 = vpop.f32.mrf.mxu0
    %v748 = vadd.f32 %v571, %v747
    %v749 = vpop.f32.mrf.mxu0
    %v750 = vadd.f32 %v576, %v749
    %751 = vmatmul.bf16.gmra.mxu0 %v603
    %v752 = vpop.f32.mrf.mxu0
    %v753 = vadd.f32 %v581, %v752
    %v754 = vpop.f32.mrf.mxu0
    %v755 = vadd.f32 %v586, %v754
    %756 = vdwg.mxu0
    %v757 = vmax.f32 %v615, 0.0
    %v758 = vmax.f32 %v634, 0.0
    %v759 = vmax.f32 %v653, 0.0
    %v760 = vmax.f32 %v672, 0.0
    %v761 = vmax.f32 %v691, 0.0
    %v762 = vmax.f32 %v710, 0.0
    %v763 = vmax.f32 %v729, 0.0
    %v764 = vmax.f32 %v748, 0.0
    %v765 = vmax.f32 %v617, 0.0
    %v766 = vmax.f32 %v636, 0.0
    %v767 = vmax.f32 %v655, 0.0
    %v768 = vmax.f32 %v674, 0.0
    %v769 = vmax.f32 %v693, 0.0
    %v770 = vmax.f32 %v712, 0.0
    %v771 = vmax.f32 %v731, 0.0
    %v772 = vmax.f32 %v750, 0.0
    %v773 = vmax.f32 %v620, 0.0
    %v774 = vmax.f32 %v639, 0.0
    %v775 = vmax.f32 %v658, 0.0
    %v776 = vmax.f32 %v677, 0.0
    %v777 = vmax.f32 %v696, 0.0
    %v778 = vmax.f32 %v715, 0.0
    %v779 = vmax.f32 %v734, 0.0
    %v780 = vmax.f32 %v753, 0.0
    %v781 = vmax.f32 %v622, 0.0
    %v782 = vmax.f32 %v641, 0.0
    %v783 = vmax.f32 %v660, 0.0
    %v784 = vmax.f32 %v679, 0.0
    %v785 = vmax.f32 %v698, 0.0
    %v786 = vmax.f32 %v717, 0.0
    %v787 = vmax.f32 %v736, 0.0
    %v788 = vmax.f32 %v755, 0.0
    %v789 = vld [vmem:[%s5] sm:$0x7]
    %v790 = vpack.c.bf16 %v765, %v757
    %v791 = vpack.c.bf16 %v766, %v758
    %v792 = vpack.c.bf16 %v767, %v759
    %v793 = vpack.c.bf16 %v768, %v760
    %v794 = vpack.c.bf16 %v769, %v761
    %v795 = vpack.c.bf16 %v770, %v762
    %v796 = vpack.c.bf16 %v771, %v763
    %v797 = vpack.c.bf16 %v772, %v764
    %v798 = vpack.c.bf16 %v781, %v773
    %v799 = vpack.c.bf16 %v782, %v774
    %v800 = vpack.c.bf16 %v783, %v775
    %v801 = vpack.c.bf16 %v784, %v776
    %v802 = vpack.c.bf16 %v785, %v777
    %v803 = vpack.c.bf16 %v786, %v778
    %v804 = vpack.c.bf16 %v787, %v779
    %v805 = vpack.c.bf16 %v788, %v780
    %v806 = vld [vmem:[%s6] sm:$0x3f]
    %808 = vset.pattern.permute.xlu0 0
    %809 = vperm.xlu0 %808, %v806
    %v810 = vpop.permute.xlu0 %809
    %vm812 = vcmask 261120
    %v814 = vsel %vm812, %v789, 0
    %816 = vmatpush.bf16.msra.mxu0 0
    %817 = vmatpush.bf16.msra.mxu0 0
    %818 = vmatpush.bf16.msra.mxu0 0
    %819 = vmatpush.bf16.msra.mxu0 0
    %820 = vmatpush.bf16.msra.mxu0 0
    %821 = vmatpush.bf16.msra.mxu0 0
    %822 = vmatpush.bf16.msra.mxu0 %v798
    %823 = vmatpush.bf16.msra.mxu0 %v790
    %824 = vmatmul.bf16.gmra.mxu0 %v814
    %v825 = vpop.f32.mrf.mxu0
    %v826 = vadd.f32 %v810, %v825
    %v827 = vpop.f32.mrf.mxu0
    %828 = vdwg.mxu0
    %829 = vmatpush.bf16.msra.mxu0 0
    %830 = vmatpush.bf16.msra.mxu0 0
    %831 = vmatpush.bf16.msra.mxu0 0
    %832 = vmatpush.bf16.msra.mxu0 0
    %833 = vmatpush.bf16.msra.mxu0 0
    %834 = vmatpush.bf16.msra.mxu0 0
    %835 = vmatpush.bf16.msra.mxu0 %v799
    %836 = vmatpush.bf16.msra.mxu0 %v791
    %837 = vmatmul.bf16.gmra.mxu0 %v814
    %v838 = vpop.f32.mrf.mxu0
    %v839 = vadd.f32 %v810, %v838
    %v840 = vpop.f32.mrf.mxu0
    %841 = vdwg.mxu0
    %842 = vmatpush.bf16.msra.mxu0 0
    %843 = vmatpush.bf16.msra.mxu0 0
    %844 = vmatpush.bf16.msra.mxu0 0
    %845 = vmatpush.bf16.msra.mxu0 0
    %846 = vmatpush.bf16.msra.mxu0 0
    %847 = vmatpush.bf16.msra.mxu0 0
    %848 = vmatpush.bf16.msra.mxu0 %v800
    %849 = vmatpush.bf16.msra.mxu0 %v792
    %850 = vmatmul.bf16.gmra.mxu0 %v814
    %v851 = vpop.f32.mrf.mxu0
    %v852 = vadd.f32 %v810, %v851
    %v853 = vpop.f32.mrf.mxu0
    %854 = vdwg.mxu0
    %855 = vmatpush.bf16.msra.mxu0 0
    %856 = vmatpush.bf16.msra.mxu0 0
    %857 = vmatpush.bf16.msra.mxu0 0
    %858 = vmatpush.bf16.msra.mxu0 0
    %859 = vmatpush.bf16.msra.mxu0 0
    %860 = vmatpush.bf16.msra.mxu0 0
    %861 = vmatpush.bf16.msra.mxu0 %v801
    %862 = vmatpush.bf16.msra.mxu0 %v793
    %863 = vmatmul.bf16.gmra.mxu0 %v814
    %v864 = vpop.f32.mrf.mxu0
    %v865 = vadd.f32 %v810, %v864
    %v866 = vpop.f32.mrf.mxu0
    %867 = vdwg.mxu0
    %868 = vmatpush.bf16.msra.mxu0 0
    %869 = vmatpush.bf16.msra.mxu0 0
    %870 = vmatpush.bf16.msra.mxu0 0
    %871 = vmatpush.bf16.msra.mxu0 0
    %872 = vmatpush.bf16.msra.mxu0 0
    %873 = vmatpush.bf16.msra.mxu0 0
    %874 = vmatpush.bf16.msra.mxu0 %v802
    %875 = vmatpush.bf16.msra.mxu0 %v794
    %876 = vmatmul.bf16.gmra.mxu0 %v814
    %v877 = vpop.f32.mrf.mxu0
    %v878 = vadd.f32 %v810, %v877
    %v879 = vpop.f32.mrf.mxu0
    %880 = vdwg.mxu0
    %881 = vmatpush.bf16.msra.mxu0 0
    %882 = vmatpush.bf16.msra.mxu0 0
    %883 = vmatpush.bf16.msra.mxu0 0
    %884 = vmatpush.bf16.msra.mxu0 0
    %885 = vmatpush.bf16.msra.mxu0 0
    %886 = vmatpush.bf16.msra.mxu0 0
    %887 = vmatpush.bf16.msra.mxu0 %v803
    %888 = vmatpush.bf16.msra.mxu0 %v795
    %889 = vmatmul.bf16.gmra.mxu0 %v814
    %v890 = vpop.f32.mrf.mxu0
    %v891 = vadd.f32 %v810, %v890
    %v892 = vpop.f32.mrf.mxu0
    %893 = vdwg.mxu0
    %894 = vmatpush.bf16.msra.mxu0 0
    %895 = vmatpush.bf16.msra.mxu0 0
    %896 = vmatpush.bf16.msra.mxu0 0
    %897 = vmatpush.bf16.msra.mxu0 0
    %898 = vmatpush.bf16.msra.mxu0 0
    %899 = vmatpush.bf16.msra.mxu0 0
    %900 = vmatpush.bf16.msra.mxu0 %v804
    %901 = vmatpush.bf16.msra.mxu0 %v796
    %902 = vmatmul.bf16.gmra.mxu0 %v814
    %v903 = vpop.f32.mrf.mxu0
    %v904 = vadd.f32 %v810, %v903
    %v905 = vpop.f32.mrf.mxu0
    %906 = vdwg.mxu0
    %907 = vmatpush.bf16.msra.mxu0 0
    %908 = vmatpush.bf16.msra.mxu0 0
    %909 = vmatpush.bf16.msra.mxu0 0
    %910 = vmatpush.bf16.msra.mxu0 0
    %911 = vmatpush.bf16.msra.mxu0 0
    %912 = vmatpush.bf16.msra.mxu0 0
    %913 = vmatpush.bf16.msra.mxu0 %v805
    %914 = vmatpush.bf16.msra.mxu0 %v797
    %915 = vmatmul.bf16.gmra.mxu0 %v814
    %v916 = vpop.f32.mrf.mxu0
    %v917 = vadd.f32 %v810, %v916
    %v918 = vpop.f32.mrf.mxu0
    %919 = vdwg.mxu0
    %920 = vst [vmem:[#allocation2] sm:$0x3f] %v826
    %921 = vst [vmem:[#allocation2 + $0x8] sm:$0x3f] %v839
    %922 = vst [vmem:[#allocation2 + $0x10] sm:$0x3f] %v852
    %923 = vst [vmem:[#allocation2 + $0x18] sm:$0x3f] %v865
    %924 = vst [vmem:[#allocation2 + $0x20] sm:$0x3f] %v878
    %925 = vst [vmem:[#allocation2 + $0x28] sm:$0x3f] %v891
    %926 = vst [vmem:[#allocation2 + $0x30] sm:$0x3f] %v904
    %927 = vst [vmem:[#allocation2 + $0x38] sm:$0x3f] %v917
    // Predicated region
    $region30: #{tpu_custom_call.1} parent=1 // pred_check
      _
    $region31: #{tpu_custom_call.1} parent=1 // pred_check_branch
      %929 = sbr.rel (0) target = $region33
    $region32: #{tpu_custom_call.1} parent=1 // pred_region
      %931 = vsyncadd [#allocation3], 0
      %s933 = sshll.u32 [#allocation2], 4
      %s934 = int_to_ptr.vmem [resolvable:$true] %s933
      %s935 = sshll.u32 %s7, 4
      %s936 = int_to_ptr.hbm [resolvable:$true] %s935
      %938 = dma.vmem_to_hbm [thread:$0]  %s934, 1024, %s936, [#allocation3]
    $region33: #{tpu_custom_call.1} parent=1 // pred_fallthru
      _
    // Predicated region
    $region34: #{tpu_custom_call.1} parent=1 // pred_check
      _
    $region35: #{tpu_custom_call.1} parent=1 // pred_check_branch
      %940 = sbr.rel (0) target = $region37
    $region36: #{tpu_custom_call.1} parent=1 // pred_region
      %942 = dma.done [#allocation3], 1024
    $region37: #{tpu_custom_call.1} parent=1 // pred_fallthru
      _
    %943 = vsyncpa [#allocation3], 1

</llo_original>
